<compile_context>
chip_gen: v5e
topology: v5e:2x2
jax: 0.10.0
libtpu: 0.0.40
codegen_flags: <defaults>
</compile_context>

<pallas_src>
import functools

import jax
import jax.numpy as jnp
from jax import lax
from jax.experimental import pallas as pl
from jax.experimental.pallas import tpu as pltpu


# ------------------------------- kernel body ---------------------------------


def _sdpa_kernel(*refs, inv_temperature, min_val, has_mask, return_attn):
    if has_mask:
        q_ref, k_ref, v_ref, m_ref = refs[:4]
        rest = refs[4:]
    else:
        q_ref, k_ref, v_ref = refs[:3]
        m_ref = None
        rest = refs[3:]
    if return_attn:
        out_ref, attn_ref, qs_ref = rest
    else:
        out_ref, qs_ref = rest
        attn_ref = None

    # Fold 1/temperature into the (b, h)-resident q tile once per Lk sweep.
    # kt (grid axis 2) is innermost and marked "arbitrary", so program_id(2)==0
    # marks the first visit of this q block even with megacore grid splitting.
    @pl.when(pl.program_id(2) == 0)
    def _():
        qs_ref[...] = q_ref[...] * inv_temperature

    q = qs_ref[...]                                  # (TH, Lq, D), input dtype
    k = k_ref[...]                                   # (TH, TLk, D)
    v = v_ref[...]                                   # (TH, Lq, Dv)

    # scores[t, kk, qq] = sum_d k[t, kk, d] * q[t, qq, d]
    # (contraction over last axes, batch over packed heads: no materialized q.T)
    scores = lax.dot_general(
        k, q, dimension_numbers=(((2,), (2,)), ((0,), (0,))),
        preferred_element_type=jnp.float32)          # (TH, TLk, Lq), f32

    if has_mask:
        # masked_fill(mask == 0, min_val) -- faithful to the module.
        # TODO(synk): the module default min_val=-1e-15 barely suppresses masked
        # entries after softmax; pass e.g. -1e9 if real masking is intended.
        scores = jnp.where(m_ref[...] == 0, jnp.float32(min_val), scores)

    # numerically-stable softmax over Lq (stats in f32)
    row_max = jnp.max(scores, axis=-1, keepdims=True)
    e = jnp.exp(scores - row_max)
    denom = jnp.sum(e, axis=-1, keepdims=True)
    if return_attn:
        attn = e / denom                             # exact: user-visible rows sum to 1
    else:
        attn = e * pl.reciprocal(denom, approx=True)  # EUP vrcp; attn never leaves the chip

    attn_lo = attn.astype(v.dtype)                   # single low-precision cast, reused
    out = lax.dot_general(
        attn_lo, v, dimension_numbers=(((2,), (1,)), ((0,), (0,))),
        preferred_element_type=jnp.float32)          # (TH, TLk, Dv)

    out_ref[...] = out.astype(out_ref.dtype)
    if return_attn:
        if attn_ref.dtype == attn_lo.dtype:
            attn_ref[...] = attn_lo
        else:
            attn_ref[...] = attn.astype(attn_ref.dtype)


# ---------------------------- tiling / VMEM helpers ---------------------------


def _round_up(x, m):
    return ((x + m - 1) // m) * m


def _vmem_capacity_bytes():
    try:
        info = pltpu.get_tpu_info()
        cap = int(getattr(info, "vmem_capacity_bytes", 0) or 0)
        if cap > 0:
            return cap
    except Exception:
        pass
    return 64 << 20            # conservative default (v7x: 64 MiB per TensorCore)


def _vmem_estimate(th, tlk, Lq, D, Dv, qkv_isz, out_isz, attn_isz,
                   mask_blk_bytes, return_attn):
    """Working-set estimate: 2x double-buffered blocks + f32 intermediates + scratch."""
    q_blk = th * Lq * D * qkv_isz
    k_blk = th * tlk * D * qkv_isz
    v_blk = th * Lq * Dv * qkv_isz
    o_blk = th * tlk * Dv * out_isz
    a_blk = th * tlk * Lq * attn_isz if return_attn else 0
    dbuf = 2 * (q_blk + k_blk + v_blk + mask_blk_bytes(th, tlk)) + 2 * (o_blk + a_blk)
    interm = 3 * th * tlk * Lq * 4 + th * tlk * Dv * 4   # f32 scores/exp/attn + f32 acc
    return dbuf + interm + q_blk                          # + scaled-q scratch


def _select_tiles(H, Lq, Lk, est_fn, budget):
    """Pick (TH, TLk): biggest blocks whose estimated working set fits the budget."""
    if Lq >= 128:
        th_cands = [1]
    else:
        # Pack heads so per-step work is big enough to amortize ~0.35us/step overhead.
        row_target = 1024 if budget > (64 << 20) else 256
        cap = max(1, row_target // max(Lq, 1))
        th_cands = [t for t in range(min(H, cap), 0, -1) if H % t == 0] or [1]

    tlk_target = 2048 if budget > (64 << 20) else 512    # v5e/v6e vs v7x
    ceiling = max(32, min(_round_up(max(Lk, 1), 32), tlk_target))
    tlk_cands = [t for t in (4096, 2048, 1024, 512, 256, 128, 64, 32) if t <= ceiling]

    for th in th_cands:
        for tlk in tlk_cands:
            if est_fn(th, tlk) <= budget:
                return th, tlk
    return th_cands[-1], tlk_cands[-1]


# --------------------------------- wrapper ------------------------------------


def scaled_dot_product_attention(queries, keys, values, mask=None, *,
                                 temperature, dropout=0.0, min_val=-1e-15,
                                 return_attn=True, attn_dtype=None,
                                 k_tile=None, head_tile=None):
    """Pallas TPU implementation of ScaledDotProductAttention.forward.

    queries: [B, H, Lq, D], keys: [B, H, Lk, D], values: [B, H, Lq, Dv]
    returns (output [B, H, Lk, Dv], attention [B, H, Lk, Lq]) when return_attn,
    else just the output.
    """
    if dropout != 0.0:
        # TODO(synk): dropout > 0 not implemented (module default p=0.0 is identity).
        raise NotImplementedError("dropout > 0 is not supported by this kernel")

    B, H, Lq, D = queries.shape
    Bk, Hk, Lk, Dk = keys.shape
    Bv, Hv, Lv, Dv = values.shape
    assert (Bk, Hk, Dk) == (B, H, D), "keys must be [B, H, Lk, D]"
    assert (Bv, Hv) == (B, H) and Lv == Lq, "attention @ values requires Lv == Lq"

    out_dtype = queries.dtype
    attn_dt = jnp.dtype(attn_dtype) if attn_dtype is not None else jnp.dtype(out_dtype)
    inv_temperature = 1.0 / float(temperature)

    # ---- mask prep: B/H/Lk/Lq broadcasting stays in the index_map; 1-byte masks
    # (int8/uint8/bool) avoid any HBM re-materialization pass. ---------------------
    m_arr = None
    mB = mH = mLk = mLq = 1
    if mask is not None:
        m_arr = jnp.asarray(mask)
        if m_arr.ndim < 4:
            m_arr = m_arr.reshape((1,) * (4 - m_arr.ndim) + m_arr.shape)
        mB, mH, mLk, mLq = m_arr.shape
        assert mB in (1, B) and mH in (1, H) and mLk in (1, Lk) and mLq in (1, Lq), \
            "mask must broadcast against [B, H, Lk, Lq]"
        if m_arr.dtype.itemsize != 1:
            m_arr = (m_arr != 0).astype(jnp.int8)      # 4x fewer bytes than int32/f32
        elif m_arr.dtype == jnp.bool_:
            m_arr = m_arr.astype(jnp.int8)             # cheap byte-for-byte cast

    def mask_blk_bytes(th, tlk):
        if m_arr is None:
            return 0
        return ((th if mH == H else 1) * (tlk if mLk == Lk else 1)
                * (Lq if mLq == Lq else 1) * m_arr.dtype.itemsize)

    # ---- generation-aware tile selection & scoped-VMEM budget ---------------------
    vmem_cap = _vmem_capacity_bytes()
    big_vmem = vmem_cap >= (96 << 20)                   # v5e / v6e: 128 MiB; v7x: 64 MiB
    budget = (100 << 20) if big_vmem else (52 << 20)

    qkv_isz = jnp.dtype(queries.dtype).itemsize
    out_isz = jnp.dtype(out_dtype).itemsize

    def est_fn(th, tlk):
        return _vmem_estimate(th, tlk, Lq, D, Dv, qkv_isz, out_isz,
                              attn_dt.itemsize, mask_blk_bytes, return_attn)

    th_auto, tlk_auto = _select_tiles(H, Lq, Lk, est_fn, budget)
    TH = int(head_tile) if head_tile is not None else th_auto
    assert H % TH == 0, "head_tile must divide the number of heads"
    TLk = int(k_tile) if k_tile is not None else tlk_auto
    assert TLk >= Lk or TLk % 32 == 0, \
        "k_tile must be a multiple of 32 (safe for f32/bf16 tiles & int8 masks) or >= Lk"
    TLk = min(TLk, Lk)                                  # full-Lk block if the tile is larger

    grid = (B, H // TH, pl.cdiv(Lk, TLk))               # ragged Lk: last kt block clipped

    est = est_fn(TH, TLk)
    cap_limit = (100 << 20) if big_vmem else (56 << 20)  # leave Mosaic scratch headroom
    vmem_limit = int(min(cap_limit, max(32 << 20, est + (16 << 20))))

    # ------------------------------- BlockSpecs ------------------------------------
    q_spec = pl.BlockSpec((pl.Squeezed(), TH, Lq, D), lambda b, h, kt: (b, h, 0, 0))
    k_spec = pl.BlockSpec((pl.Squeezed(), TH, TLk, D), lambda b, h, kt: (b, h, kt, 0))
    v_spec = pl.BlockSpec((pl.Squeezed(), TH, Lq, Dv), lambda b, h, kt: (b, h, 0, 0))
    o_spec = pl.BlockSpec((pl.Squeezed(), TH, TLk, Dv), lambda b, h, kt: (b, h, kt, 0))

    in_specs = [q_spec, k_spec, v_spec]
    operands = [queries, keys, values]

    if m_arr is not None:
        mh_blk = TH if mH == H else 1
        mk_blk = TLk if mLk == Lk else 1
        mq_blk = Lq if mLq == Lq else 1

        def m_index(b, h, kt):
            return (b if mB == B else 0,
                    h if mH == H else 0,
                    kt if mLk == Lk else 0,
                    0)

        in_specs.append(pl.BlockSpec((pl.Squeezed(), mh_blk, mk_blk, mq_blk), m_index))
        operands.append(m_arr)

    if return_attn:
        out_shape = (jax.ShapeDtypeStruct((B, H, Lk, Dv), out_dtype),
                     jax.ShapeDtypeStruct((B, H, Lk, Lq), attn_dt))
        out_specs = [o_spec,
                     pl.BlockSpec((pl.Squeezed(), TH, TLk, Lq),
                                  lambda b, h, kt: (b, h, kt, 0))]
    else:
        out_shape = jax.ShapeDtypeStruct((B, H, Lk, Dv), out_dtype)
        out_specs = o_spec

    kernel = functools.partial(_sdpa_kernel,
                               inv_temperature=inv_temperature,
                               min_val=float(min_val),
                               has_mask=m_arr is not None,
                               return_attn=return_attn)

    return pl.pallas_call(
        kernel,
        out_shape=out_shape,
        grid_spec=pltpu.PrefetchScalarGridSpec(
            num_scalar_prefetch=0, grid=grid,
            in_specs=in_specs, out_specs=out_specs,
            scratch_shapes=[pltpu.VMEM((TH, Lq, D), queries.dtype)]),
        compiler_params=pltpu.CompilerParams(
            # kt is "arbitrary" (scaled-q scratch is carried across it); B and the
            # head axis stay "parallel" for megacore splitting (v7x: 2 TCs / chip).
            dimension_semantics=("parallel", "parallel", "arbitrary"),
            vmem_limit_bytes=vmem_limit),
    )(*operands)


# -------------------------------- reference ------------------------------------


def _reference(queries, keys, values, mask=None, *, temperature, min_val=-1e-15):
    p = jax.lax.Precision.HIGHEST
    attn = jnp.einsum("bhkd,bhqd->bhkq", keys, queries, precision=p) / temperature
    if mask is not None:
        attn = jnp.where(mask == 0, min_val, attn)
    attn = jax.nn.softmax(attn, axis=-1)
    out = jnp.einsum("bhkq,bhqd->bhkd", attn, values, precision=p)
    return out, attn


if __name__ == "__main__":
    root = jax.random.PRNGKey(0)
    B, H, L, Dh = 2, 4, 8, 32
    kq, kk, kv, km, k2 = jax.random.split(root, 5)
    q = jax.random.normal(kq, (B, H, L, Dh), dtype=jnp.float32)
    k = jax.random.normal(kk, (B, H, L, Dh), dtype=jnp.float32)
    v = jax.random.normal(kv, (B, H, L, Dh), dtype=jnp.float32)
    temperature = float(Dh) ** 0.5
    tol = dict(atol=3e-2, rtol=3e-2)

    # 1) no mask, attention returned (exact softmax normalization, head packing)
    out, attn = scaled_dot_product_attention(q, k, v, temperature=temperature)
    jax.block_until_ready((out, attn))
    out_r, attn_r = _reference(q, k, v, temperature=temperature)
    assert out.shape == (B, H, L, Dh) and attn.shape == (B, H, L, L)
    assert jnp.allclose(out, out_r, **tol)
    assert jnp.allclose(attn, attn_r, **tol)

    # 2) [B, 1, L, L] int32 mask (index-map broadcast over heads, int8 mask stream)
    mask = (jax.random.uniform(km, (B, 1, L, L)) > 0.3).astype(jnp.int32)
    out_m, attn_m = scaled_dot_product_attention(q, k, v, mask, temperature=temperature)
    jax.block_until_ready((out_m, attn_m))
    out_mr, attn_mr = _reference(q, k, v, mask, temperature=temperature)
    assert jnp.allclose(out_m, out_mr, **tol)
    assert jnp.allclose(attn_m, attn_mr, **tol)

    # 3) return_attn=False fast path (drops the dominant attn HBM stream)
    out_f = scaled_dot_product_attention(q, k, v, temperature=temperature,
                                         return_attn=False)
    jax.block_until_ready(out_f)
    assert out_f.shape == (B, H, L, Dh)
    assert jnp.allclose(out_f, out_r, **tol)

    # 4) ragged Lk (80) with forced k_tile=32 -> cdiv grid with a clipped last block
    Lk2, Lq2 = 80, 8
    kq2, kk2, kv2, km2 = jax.random.split(k2, 4)
    q2 = jax.random.normal(kq2, (B, H, Lq2, Dh), dtype=jnp.float32)
    k2a = jax.random.normal(kk2, (B, H, Lk2, Dh), dtype=jnp.float32)
    v2 = jax.random.normal(kv2, (B, H, Lq2, Dh), dtype=jnp.float32)
    m2 = (jax.random.uniform(km2, (B, 1, Lk2, Lq2)) > 0.3).astype(jnp.int32)
    out2, attn2 = scaled_dot_product_attention(q2, k2a, v2, m2,
                                               temperature=temperature, k_tile=32)
    jax.block_until_ready((out2, attn2))
    out2r, attn2r = _reference(q2, k2a, v2, m2, temperature=temperature)
    assert out2.shape == (B, H, Lk2, Dh) and attn2.shape == (B, H, Lk2, Lq2)
    assert jnp.allclose(out2, out2r, **tol)
    assert jnp.allclose(attn2, attn2r, **tol)

    print("KERNEL_OK")
</pallas_src>

<mosaic_0001>
module attributes {stable_mosaic.version = 11 : i64} {
  func.func @_sdpa_kernel(%arg0: i32, %arg1: i32, %arg2: i32, %arg3: memref<1x4x8x32xf32, #tpu.memory_space<vmem>>, %arg4: memref<1x4x8x32xf32, #tpu.memory_space<vmem>>, %arg5: memref<1x4x8x32xf32, #tpu.memory_space<vmem>>, %arg6: memref<1x4x8x32xf32, #tpu.memory_space<vmem>>, %arg7: memref<1x4x8x8xf32, #tpu.memory_space<vmem>>, %arg8: memref<4x8x32xf32, #tpu.memory_space<vmem>>) attributes {dimension_semantics = [#tpu.dimension_semantics<parallel>, #tpu.dimension_semantics<parallel>, #tpu.dimension_semantics<arbitrary>], iteration_bounds = array<i64: 2, 1, 1>, scalar_prefetch = 0 : i64, scratch_operands = 1 : i64, tpu.core_type = #tpu.core_type<tc>, window_params = [{transform_indices = @transform_0, window_bounds = array<i64: 1, 4, 8, 32>}, {transform_indices = @transform_1, window_bounds = array<i64: 1, 4, 8, 32>}, {transform_indices = @transform_2, window_bounds = array<i64: 1, 4, 8, 32>}, {transform_indices = @transform_3, window_bounds = array<i64: 1, 4, 8, 32>}, {transform_indices = @transform_4, window_bounds = array<i64: 1, 4, 8, 8>}]} {
    %c0_i32 = arith.constant 0 : i32
    %0 = arith.cmpi eq, %arg2, %c0_i32 : i32
    %1 = arith.extui %0 : i1 to i32
    %c0_i32_0 = arith.constant 0 : i32
    %2 = arith.cmpi ne, %1, %c0_i32_0 : i32
    scf.if %2 {
      %c0_22 = arith.constant 0 : index
      %c0_23 = arith.constant 0 : index
      %c0_24 = arith.constant 0 : index
      %c0_25 = arith.constant 0 : index
      %25 = vector.load %arg3[%c0_22, %c0_23, %c0_24, %c0_25] : memref<1x4x8x32xf32, #tpu.memory_space<vmem>>, vector<1x4x8x32xf32>
      %26 = vector.shape_cast %25 : vector<1x4x8x32xf32> to vector<4x8x32xf32>
      %cst_26 = arith.constant 0.176776692 : f32
      %27 = vector.broadcast %cst_26 : f32 to vector<4x8x32xf32>
      %28 = arith.mulf %26, %27 : vector<4x8x32xf32>
      %c0_27 = arith.constant 0 : index
      %c0_28 = arith.constant 0 : index
      %c0_29 = arith.constant 0 : index
      %29 = vector.load %arg8[%c0_27, %c0_28, %c0_29] : memref<4x8x32xf32, #tpu.memory_space<vmem>>, vector<4x8x32xf32>
      tpu.vector_store %arg8[%c0_27, %c0_28, %c0_29], %28 {strides = array<i32>} : memref<4x8x32xf32, #tpu.memory_space<vmem>>, vector<4x8x32xf32>,
    } else {
    }
    %c0 = arith.constant 0 : index
    %c0_1 = arith.constant 0 : index
    %c0_2 = arith.constant 0 : index
    %3 = vector.load %arg8[%c0, %c0_1, %c0_2] : memref<4x8x32xf32, #tpu.memory_space<vmem>>, vector<4x8x32xf32>
    %c0_3 = arith.constant 0 : index
    %c0_4 = arith.constant 0 : index
    %c0_5 = arith.constant 0 : index
    %c0_6 = arith.constant 0 : index
    %4 = vector.load %arg4[%c0_3, %c0_4, %c0_5, %c0_6] : memref<1x4x8x32xf32, #tpu.memory_space<vmem>>, vector<1x4x8x32xf32>
    %5 = vector.shape_cast %4 : vector<1x4x8x32xf32> to vector<4x8x32xf32>
    %c0_7 = arith.constant 0 : index
    %c0_8 = arith.constant 0 : index
    %c0_9 = arith.constant 0 : index
    %c0_10 = arith.constant 0 : index
    %6 = vector.load %arg5[%c0_7, %c0_8, %c0_9, %c0_10] : memref<1x4x8x32xf32, #tpu.memory_space<vmem>>, vector<1x4x8x32xf32>
    %7 = vector.shape_cast %6 : vector<1x4x8x32xf32> to vector<4x8x32xf32>
    %cst = arith.constant dense<0.000000e+00> : vector<4x8x8xf32>
    %8 = tpu.matmul %5, %3, %cst {dimension_numbers = #tpu.dot_dimension_numbers<[2], [2], [1], [1], [0, 0, 0, 1, 1, 1], [0], [0]>} : vector<4x8x32xf32>, vector<4x8x32xf32>, vector<4x8x8xf32> -> vector<4x8x8xf32>
    %cst_11 = arith.constant dense<0xFF800000> : vector<4x8xf32>
    %9 = vector.multi_reduction <maximumf>, %8, %cst_11 [2] : vector<4x8x8xf32> to vector<4x8xf32>
    %10 = vector.shape_cast %9 : vector<4x8xf32> to vector<4x8x1xf32>
    %11 = vector.broadcast %10 : vector<4x8x1xf32> to vector<4x8x8xf32>
    %12 = arith.subf %8, %11 : vector<4x8x8xf32>
    %13 = math.exp %12 : vector<4x8x8xf32>
    %cst_12 = arith.constant dense<0.000000e+00> : vector<4x8xf32>
    %14 = vector.multi_reduction <add>, %13, %cst_12 [2] : vector<4x8x8xf32> to vector<4x8xf32>
    %15 = vector.shape_cast %14 : vector<4x8xf32> to vector<4x8x1xf32>
    %16 = vector.broadcast %15 : vector<4x8x1xf32> to vector<4x8x8xf32>
    %17 = arith.divf %13, %16 : vector<4x8x8xf32>
    %cst_13 = arith.constant dense<0.000000e+00> : vector<4x8x32xf32>
    %18 = tpu.matmul %17, %7, %cst_13 {dimension_numbers = #tpu.dot_dimension_numbers<[2], [1], [1], [2], [0, 0, 0, 1, 1, 2], [0], [0]>} : vector<4x8x8xf32>, vector<4x8x32xf32>, vector<4x8x32xf32> -> vector<4x8x32xf32>
    %c0_14 = arith.constant 0 : index
    %c0_15 = arith.constant 0 : index
    %c0_16 = arith.constant 0 : index
    %c0_17 = arith.constant 0 : index
    %19 = vector.load %arg6[%c0_14, %c0_15, %c0_16, %c0_17] : memref<1x4x8x32xf32, #tpu.memory_space<vmem>>, vector<1x4x8x32xf32>
    %20 = vector.shape_cast %19 : vector<1x4x8x32xf32> to vector<4x8x32xf32>
    %21 = vector.shape_cast %18 : vector<4x8x32xf32> to vector<1x4x8x32xf32>
    tpu.vector_store %arg6[%c0_14, %c0_15, %c0_16, %c0_17], %21 {strides = array<i32>} : memref<1x4x8x32xf32, #tpu.memory_space<vmem>>, vector<1x4x8x32xf32>,
    %c0_18 = arith.constant 0 : index
    %c0_19 = arith.constant 0 : index
    %c0_20 = arith.constant 0 : index
    %c0_21 = arith.constant 0 : index
    %22 = vector.load %arg7[%c0_18, %c0_19, %c0_20, %c0_21] : memref<1x4x8x8xf32, #tpu.memory_space<vmem>>, vector<1x4x8x8xf32>
    %23 = vector.shape_cast %22 : vector<1x4x8x8xf32> to vector<4x8x8xf32>
    %24 = vector.shape_cast %17 : vector<4x8x8xf32> to vector<1x4x8x8xf32>
    tpu.vector_store %arg7[%c0_18, %c0_19, %c0_20, %c0_21], %24 {strides = array<i32>} : memref<1x4x8x8xf32, #tpu.memory_space<vmem>>, vector<1x4x8x8xf32>,
    return
  }
  func.func @transform_0(%arg0: i32, %arg1: i32, %arg2: i32) -> (i32, i32, i32, i32) {
    %c0_i32 = arith.constant 0 : i32
    %c0_i32_0 = arith.constant 0 : i32
    %c0_i32_1 = arith.constant 0 : i32
    return %arg0, %arg1, %c0_i32, %c0_i32_0 : i32, i32, i32, i32
  }
  func.func @transform_1(%arg0: i32, %arg1: i32, %arg2: i32) -> (i32, i32, i32, i32) {
    %c0_i32 = arith.constant 0 : i32
    %c0_i32_0 = arith.constant 0 : i32
    return %arg0, %arg1, %arg2, %c0_i32 : i32, i32, i32, i32
  }
  func.func @transform_2(%arg0: i32, %arg1: i32, %arg2: i32) -> (i32, i32, i32, i32) {
    %c0_i32 = arith.constant 0 : i32
    %c0_i32_0 = arith.constant 0 : i32
    %c0_i32_1 = arith.constant 0 : i32
    return %arg0, %arg1, %c0_i32, %c0_i32_0 : i32, i32, i32, i32
  }
  func.func @transform_3(%arg0: i32, %arg1: i32, %arg2: i32) -> (i32, i32, i32, i32) {
    %c0_i32 = arith.constant 0 : i32
    %c0_i32_0 = arith.constant 0 : i32
    return %arg0, %arg1, %arg2, %c0_i32 : i32, i32, i32, i32
  }
  func.func @transform_4(%arg0: i32, %arg1: i32, %arg2: i32) -> (i32, i32, i32, i32) {
    %c0_i32 = arith.constant 0 : i32
    %c0_i32_0 = arith.constant 0 : i32
    return %arg0, %arg1, %arg2, %c0_i32 : i32, i32, i32, i32
  }
}

</mosaic_0001>

<llo_original>
// kernel: tpu_custom_call.1
$region0: #{tpu_custom_call.1}
  #allocation0 [shape = 'u32[]', space=smem, size = 0x4, offset = 0x4, fixed_abs, tag = 'smem constant byte address 0x4 - core index']
  #allocation1 [shape = 'u32[72,128]{1,0:T(1,128)}', space=vmem, size = 0x9000, scoped, tag = 'internal scratch']
  #allocation2 [shape = 'f32[4,8,32]{2,1,0:T(8,128)}', space=vmem, size = 0x4000, scoped, tag = 'scratch operand']
  %s0 = inlined_call_operand.hbm [shape: f32[2,4,8,32], index: 0, kind: input, shape index: {}]
  %s1 = inlined_call_operand.hbm [shape: f32[2,4,8,32], index: 1, kind: input, shape index: {}]
  %s2 = inlined_call_operand.hbm [shape: f32[2,4,8,32], index: 2, kind: input, shape index: {}]
  %s3 = inlined_call_operand.hbm [shape: f32[2,4,8,32], index: 3, kind: output, shape index: {0}]
  %s4 = inlined_call_operand.hbm [shape: f32[2,4,8,8], index: 4, kind: output, shape index: {1}]
  %5 = xla_tuple %s3, %s4
  %s6 = sld [smem:[#allocation0]]
  $region69: #{tpu_custom_call.1} parent=0
    _
  %s8 = ssub.s32 1, %s6
  %s9 = scalar_select 0, %s8, %s6
  $region1: #{tpu_custom_call.1} parent=0
    #allocation3 [shape = 'u8[32768]{0}', space=vmem, size = 0x8000, scoped, tag = 'input window, operand 0']
    #allocation4 [shape = 's32[2]{0}', space=sflag, size = 0x8, scoped, tag = 'scoped memory for tpu_custom_call.1']
    #allocation5 [shape = 's32[2]{0}', space=sflag, size = 0x8, scoped, tag = 'scoped memory for tpu_custom_call.1']
    #allocation6 [shape = 'u8[32768]{0}', space=vmem, size = 0x8000, scoped, tag = 'input window, operand 1']
    #allocation7 [shape = 's32[2]{0}', space=sflag, size = 0x8, scoped, tag = 'scoped memory for tpu_custom_call.1']
    #allocation8 [shape = 'u8[32768]{0}', space=vmem, size = 0x8000, scoped, tag = 'input window, operand 2']
    #allocation9 [shape = 'u8[32768]{0}', space=vmem, size = 0x8000, scoped, tag = 'output window, operand 0']
    #allocation10 [shape = 'u8[32768]{0}', space=vmem, size = 0x8000, scoped, tag = 'output window, operand 1']
    #allocation11 [shape = 's32[2]{0}', space=sflag, size = 0x8, scoped, tag = 'scoped memory for tpu_custom_call.1']
    %10 = vsyncpa [#allocation4], 0
    %s11 = scalar_lea.sflag [#allocation4], 1
    %12 = vsyncpa %s11, 0
    %13 = vsyncpa [#allocation7], 0
    %s14 = scalar_lea.sflag [#allocation7], 1
    %15 = vsyncpa %s14, 0
    %16 = vsyncpa [#allocation5], 0
    %s17 = scalar_lea.sflag [#allocation5], 1
    %18 = vsyncpa %s17, 0
    %19 = vsyncpa [#allocation11], 0
    %s20 = scalar_lea.sflag [#allocation11], 1
    %21 = vsyncpa %s20, 0
    loop: start=0, step=1, limit=4
    $region2: #{tpu_custom_call.1} parent=1 // loop_pre_header
      _
    $region3: #{tpu_custom_call.1} parent=1 // loop_header
      %s23 = sphi 0, %s27
      %p24 = scmp.ge.s32.totalorder %s23, 4
      %s30 = sphi 0, %s49
      %s31 = sphi 0, %s45
      %s32 = sphi 0, %s41
      %s33 = sphi 0, %s30
      %s34 = sphi 0, %s31
      %s35 = sphi 0, %s32
      %s36 = sphi 0, %s33
      %s37 = sphi 0, %s34
      %s38 = sphi 0, %s35
      %s54 = sphi 0, %s56
      %s57 = sphi 0, %s54
      %s58 = sphi 0, %s57
      %s74 = sphi 0, %s58
      %s84 = sphi 0, %s86
      %s87 = sphi 0, %s84
      %s88 = sphi 0, %s87
      %s104 = sphi 0, %s88
      %s112 = sphi 0, %s114
      %s115 = sphi 0, %s112
      %s116 = sphi 0, %s115
      %s132 = sphi 0, %s116
      %s142 = sphi 0, %s144
      %s145 = sphi 0, %s142
      %s146 = sphi 0, %s145
      %s162 = sphi 0, %s146
      %s172 = sphi 0, %s174
      %s175 = sphi 0, %s172
      %s176 = sphi 0, %s175
      %s192 = sphi 0, %s176
    $region4: #{tpu_custom_call.1} parent=1 // loop_header_branch
      %26 = sbr.rel (%p24) target = $region8
    $region5: #{tpu_custom_call.1} parent=1 // loop_body
      %s28 = ssub.s32 %s23, 1
      %s29 = ssub.s32 %s23, 2
      %s39 = sadd.s32 1, %s32
      %p40 = scmp.ge.s32.totalorder %s39, 1
      %s41 = scalar_select %p40, 0, %s39
      %s42 = sadd.s32 1, %s31
      %s43 = scalar_select %p40, %s42, %s31
      %p44 = scmp.ge.s32.totalorder %s43, 1
      %s45 = scalar_select %p44, 0, %s43
      %s46 = sadd.s32 1, %s30
      %s47 = scalar_select %p44, %s46, %s30
      %p48 = scmp.ge.s32.totalorder %s47, 2
      %s49 = scalar_select %p48, 0, %s47
      %s50 = ssub.s32 %s30, %s49
      %s51 = ssub.s32 %s31, %s45
      %s52 = sor.u32 %s50, %s51
      %p53 = scmp.eq.s32.totalorder %s52, 0
      %s55 = sadd.s32 %s54, 1
      %s56 = scalar_select %p53, %s54, %s55
      %p59 = pneg %p53
      %p60 = scmp.eq.s32.totalorder %s23, 1
      %p61 = por %p59, %p60
      %p62 = scmp.ne.s32.totalorder %s54, %s57
      %p63 = scmp.eq.s32.totalorder %s23, 0
      %p64 = por %p62, %p63
      %p65 = scmp.ne.s32.totalorder %s54, %s57
      %p66 = scmp.eq.s32.totalorder %s28, 1
      %p67 = por %p65, %p66
      %p68 = scmp.ne.s32.totalorder %s57, %s58
      %p69 = scmp.eq.s32.totalorder %s28, 0
      %p70 = por %p68, %p69
      %p71 = scmp.ne.s32.totalorder %s57, %s58
      %p72 = scmp.eq.s32.totalorder %s29, 1
      %p73 = por %p71, %p72
      %p75 = scmp.ne.s32.totalorder %s58, %s74
      %p76 = scmp.eq.s32.totalorder %s29, 0
      %p77 = por %p75, %p76
      %s78 = ssub.s32 %s30, %s49
      %s79 = ssub.s32 %s31, %s45
      %s80 = sor.u32 %s78, %s79
      %s81 = ssub.s32 %s32, %s41
      %s82 = sor.u32 %s80, %s81
      %p83 = scmp.eq.s32.totalorder %s82, 0
      %s85 = sadd.s32 %s84, 1
      %s86 = scalar_select %p83, %s84, %s85
      %p89 = pneg %p83
      %p90 = scmp.eq.s32.totalorder %s23, 1
      %p91 = por %p89, %p90
      %p92 = scmp.ne.s32.totalorder %s84, %s87
      %p93 = scmp.eq.s32.totalorder %s23, 0
      %p94 = por %p92, %p93
      %p95 = scmp.ne.s32.totalorder %s84, %s87
      %p96 = scmp.eq.s32.totalorder %s28, 1
      %p97 = por %p95, %p96
      %p98 = scmp.ne.s32.totalorder %s87, %s88
      %p99 = scmp.eq.s32.totalorder %s28, 0
      %p100 = por %p98, %p99
      %p101 = scmp.ne.s32.totalorder %s87, %s88
      %p102 = scmp.eq.s32.totalorder %s29, 1
      %p103 = por %p101, %p102
      %p105 = scmp.ne.s32.totalorder %s88, %s104
      %p106 = scmp.eq.s32.totalorder %s29, 0
      %p107 = por %p105, %p106
      %s108 = ssub.s32 %s30, %s49
      %s109 = ssub.s32 %s31, %s45
      %s110 = sor.u32 %s108, %s109
      %p111 = scmp.eq.s32.totalorder %s110, 0
      %s113 = sadd.s32 %s112, 1
      %s114 = scalar_select %p111, %s112, %s113
      %p117 = pneg %p111
      %p118 = scmp.eq.s32.totalorder %s23, 1
      %p119 = por %p117, %p118
      %p120 = scmp.ne.s32.totalorder %s112, %s115
      %p121 = scmp.eq.s32.totalorder %s23, 0
      %p122 = por %p120, %p121
      %p123 = scmp.ne.s32.totalorder %s112, %s115
      %p124 = scmp.eq.s32.totalorder %s28, 1
      %p125 = por %p123, %p124
      %p126 = scmp.ne.s32.totalorder %s115, %s116
      %p127 = scmp.eq.s32.totalorder %s28, 0
      %p128 = por %p126, %p127
      %p129 = scmp.ne.s32.totalorder %s115, %s116
      %p130 = scmp.eq.s32.totalorder %s29, 1
      %p131 = por %p129, %p130
      %p133 = scmp.ne.s32.totalorder %s116, %s132
      %p134 = scmp.eq.s32.totalorder %s29, 0
      %p135 = por %p133, %p134
      %s136 = ssub.s32 %s30, %s49
      %s137 = ssub.s32 %s31, %s45
      %s138 = sor.u32 %s136, %s137
      %s139 = ssub.s32 %s32, %s41
      %s140 = sor.u32 %s138, %s139
      %p141 = scmp.eq.s32.totalorder %s140, 0
      %s143 = sadd.s32 %s142, 1
      %s144 = scalar_select %p141, %s142, %s143
      %p147 = pneg %p141
      %p148 = scmp.eq.s32.totalorder %s23, 1
      %p149 = por %p147, %p148
      %p150 = scmp.ne.s32.totalorder %s142, %s145
      %p151 = scmp.eq.s32.totalorder %s23, 0
      %p152 = por %p150, %p151
      %p153 = scmp.ne.s32.totalorder %s142, %s145
      %p154 = scmp.eq.s32.totalorder %s28, 1
      %p155 = por %p153, %p154
      %p156 = scmp.ne.s32.totalorder %s145, %s146
      %p157 = scmp.eq.s32.totalorder %s28, 0
      %p158 = por %p156, %p157
      %p159 = scmp.ne.s32.totalorder %s145, %s146
      %p160 = scmp.eq.s32.totalorder %s29, 1
      %p161 = por %p159, %p160
      %p163 = scmp.ne.s32.totalorder %s146, %s162
      %p164 = scmp.eq.s32.totalorder %s29, 0
      %p165 = por %p163, %p164
      %s166 = ssub.s32 %s30, %s49
      %s167 = ssub.s32 %s31, %s45
      %s168 = sor.u32 %s166, %s167
      %s169 = ssub.s32 %s32, %s41
      %s170 = sor.u32 %s168, %s169
      %p171 = scmp.eq.s32.totalorder %s170, 0
      %s173 = sadd.s32 %s172, 1
      %s174 = scalar_select %p171, %s172, %s173
      %p177 = pneg %p171
      %p178 = scmp.eq.s32.totalorder %s23, 1
      %p179 = por %p177, %p178
      %p180 = scmp.ne.s32.totalorder %s172, %s175
      %p181 = scmp.eq.s32.totalorder %s23, 0
      %p182 = por %p180, %p181
      %p183 = scmp.ne.s32.totalorder %s172, %s175
      %p184 = scmp.eq.s32.totalorder %s28, 1
      %p185 = por %p183, %p184
      %p186 = scmp.ne.s32.totalorder %s175, %s176
      %p187 = scmp.eq.s32.totalorder %s28, 0
      %p188 = por %p186, %p187
      %p189 = scmp.ne.s32.totalorder %s175, %s176
      %p190 = scmp.eq.s32.totalorder %s29, 1
      %p191 = por %p189, %p190
      %p193 = scmp.ne.s32.totalorder %s176, %s192
      %p194 = scmp.eq.s32.totalorder %s29, 0
      %p195 = por %p193, %p194
      %p196 = scmp.le.s32.totalorder 1, %s23
      %p197 = scmp.lt.s32.totalorder %s23, 3
      %p198 = pnand %p196, %p197
      %p199 = pneg %p198
      // Predicated region
      $region9: #{tpu_custom_call.1} parent=5 // pred_check
        _
      $region10: #{tpu_custom_call.1} parent=5 // pred_check_branch
        %201 = sbr.rel (%p198) target = $region12
      $region11: #{tpu_custom_call.1} parent=5 // pred_region
        %s202 = ssub.s32 %s23, 1
      $region12: #{tpu_custom_call.1} parent=5 // pred_fallthru
        _
      %p203 = scmp.lt.s32.totalorder %s23, 2
      // Predicated region
      $region13: #{tpu_custom_call.1} parent=5 // pred_check
        %p204 = pneg %p203
      $region14: #{tpu_custom_call.1} parent=5 // pred_check_branch
        %206 = sbr.rel (%p204) target = $region16
      $region15: #{tpu_custom_call.1} parent=5 // pred_region
        // Predicated region
        $region17: #{tpu_custom_call.1} parent=15 // pred_check
          %p207 = pneg %p64
        $region18: #{tpu_custom_call.1} parent=15 // pred_check_branch
          %209 = sbr.rel (%p207) target = $region20
        $region19: #{tpu_custom_call.1} parent=15 // pred_region
          %s210 = sand.u32 %s54, 1
          %s211 = scalar_lea.sflag [#allocation4], %s210
          %s212 = sand.u32 %s54, 1
          %s213 = smul.addr %s212, 32
          %s214 = scalar_lea.vmem [#allocation3], %s213
          %s215 = smul.u32 4, %s31
          %217 = vsyncadd %s211, 0
          %s218 = smul.addr %s30, 4
          %s219 = sadd.s32 %s215, %s218
          %s220 = smul.addr %s219, 8
          %s221 = scalar_lea.hbm %s0, %s220
          %s222 = sshll.u32 %s221, 4
          %s223 = int_to_ptr.hbm [resolvable:$true] %s222
          %s224 = sshll.u32 %s214, 4
          %s225 = int_to_ptr.vmem [resolvable:$true] %s224
          %230 = dma.hbm_to_vmem [thread:$0]  %s223, 512, %s225, %s211, 128, 128, 8
        $region20: #{tpu_custom_call.1} parent=15 // pred_fallthru
          _
        // Predicated region
        $region21: #{tpu_custom_call.1} parent=15 // pred_check
          %p231 = pneg %p94
        $region22: #{tpu_custom_call.1} parent=15 // pred_check_branch
          %233 = sbr.rel (%p231) target = $region24
        $region23: #{tpu_custom_call.1} parent=15 // pred_region
          %s234 = sand.u32 %s23, 1
          %s235 = scalar_lea.sflag [#allocation7], %s234
          %s236 = sand.u32 %s84, 1
          %s237 = smul.addr %s236, 32
          %s238 = scalar_lea.vmem [#allocation6], %s237
          %s239 = smul.u32 4, %s31
          %241 = vsyncadd %s235, 0
          %s242 = sadd.s32 %s32, %s239
          %s243 = smul.addr %s30, 4
          %s244 = sadd.s32 %s242, %s243
          %s245 = smul.addr %s244, 8
          %s246 = scalar_lea.hbm %s1, %s245
          %s247 = sshll.u32 %s246, 4
          %s248 = int_to_ptr.hbm [resolvable:$true] %s247
          %s249 = sshll.u32 %s238, 4
          %s250 = int_to_ptr.vmem [resolvable:$true] %s249
          %255 = dma.hbm_to_vmem [thread:$0]  %s248, 512, %s250, %s235, 128, 128, 8
        $region24: #{tpu_custom_call.1} parent=15 // pred_fallthru
          _
        // Predicated region
        $region25: #{tpu_custom_call.1} parent=15 // pred_check
          %p256 = pneg %p122
        $region26: #{tpu_custom_call.1} parent=15 // pred_check_branch
          %258 = sbr.rel (%p256) target = $region28
        $region27: #{tpu_custom_call.1} parent=15 // pred_region
          %s259 = sand.u32 %s23, 1
          %s260 = scalar_lea.sflag [#allocation7], %s259
          %s261 = sand.u32 %s112, 1
          %s262 = smul.addr %s261, 32
          %s263 = scalar_lea.vmem [#allocation8], %s262
          %s264 = smul.u32 4, %s31
          %266 = vsyncadd %s260, 0
          %s267 = smul.addr %s30, 4
          %s268 = sadd.s32 %s264, %s267
          %s269 = smul.addr %s268, 8
          %s270 = scalar_lea.hbm %s2, %s269
          %s271 = sshll.u32 %s270, 4
          %s272 = int_to_ptr.hbm [resolvable:$true] %s271
          %s273 = sshll.u32 %s263, 4
          %s274 = int_to_ptr.vmem [resolvable:$true] %s273
          %279 = dma.hbm_to_vmem [thread:$0]  %s272, 512, %s274, %s260, 128, 128, 8
        $region28: #{tpu_custom_call.1} parent=15 // pred_fallthru
          _
      $region16: #{tpu_custom_call.1} parent=5 // pred_fallthru
        _
      %p280 = scmp.le.s32.totalorder 1, %s23
      %p281 = scmp.lt.s32.totalorder %s23, 3
      %p282 = pnand %p280, %p281
      %p283 = pneg %p282
      // Predicated region
      $region29: #{tpu_custom_call.1} parent=5 // pred_check
        _
      $region30: #{tpu_custom_call.1} parent=5 // pred_check_branch
        %285 = sbr.rel (%p282) target = $region32
      $region31: #{tpu_custom_call.1} parent=5 // pred_region
        %s286 = ssub.s32 %s23, 1
        %s287 = sand.u32 %s57, 1
        %s288 = scalar_lea.sflag [#allocation4], %s287
        %s289 = sand.u32 %s57, 1
        %s290 = smul.addr %s289, 32
        %s291 = scalar_lea.vmem [#allocation3], %s290
        // Predicated region
        $region33: #{tpu_custom_call.1} parent=31 // pred_check
          %p292 = pneg %p70
        $region34: #{tpu_custom_call.1} parent=31 // pred_check_branch
          %294 = sbr.rel (%p292) target = $region36
        $region35: #{tpu_custom_call.1} parent=31 // pred_region
          %296 = dma.done %s288, 512
        $region36: #{tpu_custom_call.1} parent=31 // pred_fallthru
          _
        %s297 = sand.u32 %s28, 1
        %s298 = scalar_lea.sflag [#allocation7], %s297
        %s299 = sand.u32 %s87, 1
        %s300 = smul.addr %s299, 32
        %s301 = scalar_lea.vmem [#allocation6], %s300
        // Predicated region
        $region37: #{tpu_custom_call.1} parent=31 // pred_check
          %p302 = pneg %p100
        $region38: #{tpu_custom_call.1} parent=31 // pred_check_branch
          %304 = sbr.rel (%p302) target = $region40
        $region39: #{tpu_custom_call.1} parent=31 // pred_region
          %306 = dma.done %s298, 512
        $region40: #{tpu_custom_call.1} parent=31 // pred_fallthru
          _
        %s307 = sand.u32 %s28, 1
        %s308 = scalar_lea.sflag [#allocation7], %s307
        %s309 = sand.u32 %s115, 1
        %s310 = smul.addr %s309, 32
        %s311 = scalar_lea.vmem [#allocation8], %s310
        // Predicated region
        $region41: #{tpu_custom_call.1} parent=31 // pred_check
          %p312 = pneg %p128
        $region42: #{tpu_custom_call.1} parent=31 // pred_check_branch
          %314 = sbr.rel (%p312) target = $region44
        $region43: #{tpu_custom_call.1} parent=31 // pred_region
          %316 = dma.done %s308, 512
        $region44: #{tpu_custom_call.1} parent=31 // pred_fallthru
          _
        %s317 = sand.u32 %s57, 1
        %s318 = scalar_lea.sflag [#allocation4], %s317
        %s319 = sand.u32 %s57, 1
        %s320 = smul.addr %s319, 32
        %s321 = scalar_lea.vmem [#allocation3], %s320
        %p322 = pneg %p70
        %p323 = pneg %p67
        %s324 = sand.u32 %s28, 1
        %s325 = scalar_lea.sflag [#allocation7], %s324
        %s326 = sand.u32 %s87, 1
        %s327 = smul.addr %s326, 32
        %s328 = scalar_lea.vmem [#allocation6], %s327
        %p329 = pneg %p100
        %p330 = pneg %p97
        %s331 = sand.u32 %s28, 1
        %s332 = scalar_lea.sflag [#allocation7], %s331
        %s333 = sand.u32 %s115, 1
        %s334 = smul.addr %s333, 32
        %s335 = scalar_lea.vmem [#allocation8], %s334
        %p336 = pneg %p128
        %p337 = pneg %p125
        %p338 = pneg %p158
        %p339 = pneg %p155
        %s340 = sand.u32 %s145, 1
        %s341 = scalar_lea.sflag [#allocation5], %s340
        %s342 = sand.u32 %s145, 1
        %s343 = smul.addr %s342, 32
        %s344 = scalar_lea.vmem [#allocation9], %s343
        %p345 = pneg %p188
        %p346 = pneg %p185
        %s347 = sand.u32 %s175, 1
        %s348 = scalar_lea.sflag [#allocation11], %s347
        %s349 = sand.u32 %s175, 1
        %s350 = smul.addr %s349, 32
        %s351 = scalar_lea.vmem [#allocation10], %s350
        %s352 = smul.u32 4, %s34
        %s353 = smul.u32 4, %s34
        %s354 = smul.u32 4, %s34
        %s355 = smul.u32 4, %s34
        %s356 = smul.u32 4, %s34
        %p357 = scmp.eq.s32.totalorder %s35, 0
        // Predicated region
        $region45: #{tpu_custom_call.1} parent=31 // pred_check
          %p358 = pneg %p357
        $region46: #{tpu_custom_call.1} parent=31 // pred_check_branch
          %360 = sbr.rel (%p358) target = $region48
        $region47: #{tpu_custom_call.1} parent=31 // pred_region
          %v361 = vld [vmem:[%s291] sm:$0xff]
          %v362 = vld [vmem:[%s291 + $0x8] sm:$0xff]
          %v363 = vld [vmem:[%s291 + $0x10] sm:$0xff]
          %v364 = vld [vmem:[%s291 + $0x18] sm:$0xff]
          %v365 = vmul.f32 %v361, 0.17677669
          %v366 = vmul.f32 %v362, 0.17677669
          %v367 = vmul.f32 %v363, 0.17677669
          %v368 = vmul.f32 %v364, 0.17677669
          %vm369 = vcmask 261120
          %370 = vst.msk [vmem:[#allocation2] sm:$0xff] %vm369, %v365
          %371 = vst.msk [vmem:[#allocation2 + $0x8] sm:$0xff] %vm369, %v366
          %372 = vst.msk [vmem:[#allocation2 + $0x10] sm:$0xff] %vm369, %v367
          %373 = vst.msk [vmem:[#allocation2 + $0x18] sm:$0xff] %vm369, %v368
        $region48: #{tpu_custom_call.1} parent=31 // pred_fallthru
          _
        %v374 = vld [vmem:[#allocation2] sm:$0xff]
        %v375 = vld [vmem:[#allocation2 + $0x8] sm:$0xff]
        %v376 = vld [vmem:[#allocation2 + $0x10] sm:$0xff]
        %v377 = vld [vmem:[#allocation2 + $0x18] sm:$0xff]
        %v378 = vld [vmem:[%s301] sm:$0xff]
        %v379 = vld [vmem:[%s301 + $0x8] sm:$0xff]
        %v380 = vld [vmem:[%s301 + $0x10] sm:$0xff]
        %v381 = vld [vmem:[%s301 + $0x18] sm:$0xff]
        %v382 = vld [vmem:[%s311] sm:$0xff]
        %v383 = vld [vmem:[%s311 + $0x8] sm:$0xff]
        %v384 = vld [vmem:[%s311 + $0x10] sm:$0xff]
        %v385 = vld [vmem:[%s311 + $0x18] sm:$0xff]
        %vm386 = vcmask 261120
        %v388 = vsel %vm386, %v378, 0
        %v391 = vsel %vm386, %v374, 0
        %393 = vmatpush.xpose.msra.mxu0 0.0
        %394 = vmatpush.xpose.msra.mxu0 0.0
        %395 = vmatpush.xpose.msra.mxu0 0.0
        %396 = vmatpush.xpose.msra.mxu0 0.0
        %397 = vmatpush.xpose.msra.mxu0 0.0
        %398 = vmatpush.xpose.msra.mxu0 0.0
        %399 = vmatpush.xpose.msra.mxu0 0.0
        %400 = vmatpush.xpose.msra.mxu0 0.0
        %401 = vmatpush.xpose.msra.mxu0 0.0
        %402 = vmatpush.xpose.msra.mxu0 0.0
        %403 = vmatpush.xpose.msra.mxu0 0.0
        %404 = vmatpush.xpose.msra.mxu0 0.0
        %405 = vmatpush.xpose.msra.mxu0 0.0
        %406 = vmatpush.xpose.msra.mxu0 0.0
        %407 = vmatpush.xpose.msra.mxu0 0.0
        %408 = vmatpush.xpose.msra.mxu0 %v391
        %409 = vmatmul.f32.gmra.mxu0 %v388
        %v410 = vpop.f32.mrf.mxu0
        %v411 = vadd.f32 0.0, %v410
        %412 = vdwg.mxu0
        %v414 = vsel %vm386, %v379, 0
        %v417 = vsel %vm386, %v375, 0
        %419 = vmatpush.xpose.msra.mxu0 0.0
        %420 = vmatpush.xpose.msra.mxu0 0.0
        %421 = vmatpush.xpose.msra.mxu0 0.0
        %422 = vmatpush.xpose.msra.mxu0 0.0
        %423 = vmatpush.xpose.msra.mxu0 0.0
        %424 = vmatpush.xpose.msra.mxu0 0.0
        %425 = vmatpush.xpose.msra.mxu0 0.0
        %426 = vmatpush.xpose.msra.mxu0 0.0
        %427 = vmatpush.xpose.msra.mxu0 0.0
        %428 = vmatpush.xpose.msra.mxu0 0.0
        %429 = vmatpush.xpose.msra.mxu0 0.0
        %430 = vmatpush.xpose.msra.mxu0 0.0
        %431 = vmatpush.xpose.msra.mxu0 0.0
        %432 = vmatpush.xpose.msra.mxu0 0.0
        %433 = vmatpush.xpose.msra.mxu0 0.0
        %434 = vmatpush.xpose.msra.mxu0 %v417
        %435 = vmatmul.f32.gmra.mxu0 %v414
        %v436 = vpop.f32.mrf.mxu0
        %v437 = vadd.f32 0.0, %v436
        %438 = vdwg.mxu0
        %v440 = vsel %vm386, %v380, 0
        %v443 = vsel %vm386, %v376, 0
        %445 = vmatpush.xpose.msra.mxu0 0.0
        %446 = vmatpush.xpose.msra.mxu0 0.0
        %447 = vmatpush.xpose.msra.mxu0 0.0
        %448 = vmatpush.xpose.msra.mxu0 0.0
        %449 = vmatpush.xpose.msra.mxu0 0.0
        %450 = vmatpush.xpose.msra.mxu0 0.0
        %451 = vmatpush.xpose.msra.mxu0 0.0
        %452 = vmatpush.xpose.msra.mxu0 0.0
        %453 = vmatpush.xpose.msra.mxu0 0.0
        %454 = vmatpush.xpose.msra.mxu0 0.0
        %455 = vmatpush.xpose.msra.mxu0 0.0
        %456 = vmatpush.xpose.msra.mxu0 0.0
        %457 = vmatpush.xpose.msra.mxu0 0.0
        %458 = vmatpush.xpose.msra.mxu0 0.0
        %459 = vmatpush.xpose.msra.mxu0 0.0
        %460 = vmatpush.xpose.msra.mxu0 %v443
        %461 = vmatmul.f32.gmra.mxu0 %v440
        %v462 = vpop.f32.mrf.mxu0
        %v463 = vadd.f32 0.0, %v462
        %464 = vdwg.mxu0
        %v466 = vsel %vm386, %v381, 0
        %v469 = vsel %vm386, %v377, 0
        %471 = vmatpush.xpose.msra.mxu0 0.0
        %472 = vmatpush.xpose.msra.mxu0 0.0
        %473 = vmatpush.xpose.msra.mxu0 0.0
        %474 = vmatpush.xpose.msra.mxu0 0.0
        %475 = vmatpush.xpose.msra.mxu0 0.0
        %476 = vmatpush.xpose.msra.mxu0 0.0
        %477 = vmatpush.xpose.msra.mxu0 0.0
        %478 = vmatpush.xpose.msra.mxu0 0.0
        %479 = vmatpush.xpose.msra.mxu0 0.0
        %480 = vmatpush.xpose.msra.mxu0 0.0
        %481 = vmatpush.xpose.msra.mxu0 0.0
        %482 = vmatpush.xpose.msra.mxu0 0.0
        %483 = vmatpush.xpose.msra.mxu0 0.0
        %484 = vmatpush.xpose.msra.mxu0 0.0
        %485 = vmatpush.xpose.msra.mxu0 0.0
        %486 = vmatpush.xpose.msra.mxu0 %v469
        %487 = vmatmul.f32.gmra.mxu0 %v466
        %v488 = vpop.f32.mrf.mxu0
        %v489 = vadd.f32 0.0, %v488
        %490 = vdwg.mxu0
        %vm491 = vcmask 64512
        %v492 = vsel %vm491, %v411, -inf
        %493 = vmax.xlane.f32.xlu0 %v492
        %v494 = vpop.xlane.xlu0 %493
        %v495 = vsel %vm491, %v437, -inf
        %496 = vmax.xlane.f32.xlu0 %v495
        %v497 = vpop.xlane.xlu0 %496
        %v498 = vsel %vm491, %v463, -inf
        %499 = vmax.xlane.f32.xlu0 %v498
        %v500 = vpop.xlane.xlu0 %499
        %v501 = vsel %vm491, %v489, -inf
        %502 = vmax.xlane.f32.xlu0 %v501
        %v503 = vpop.xlane.xlu0 %502
        %v504 = vsub.f32 %v411, %v494
        %v505 = vsub.f32 %v437, %v497
        %v506 = vsub.f32 %v463, %v500
        %v507 = vsub.f32 %v489, %v503
        %v508 = vmul.f32 %v504, 1.442695
        %v509 = vpow.pop %v508
        %v510 = vmul.f32 %v505, 1.442695
        %v511 = vpow.pop %v510
        %v512 = vmul.f32 %v506, 1.442695
        %v513 = vpow.pop %v512
        %v514 = vmul.f32 %v507, 1.442695
        %v515 = vpow.pop %v514
        %v516 = vsel %vm491, %v509, 0.0
        %517 = vadd.xlane.f32.xlu0 %v516
        %v518 = vpop.xlane.xlu0 %517
        %v519 = vsel %vm491, %v511, 0.0
        %520 = vadd.xlane.f32.xlu0 %v519
        %v521 = vpop.xlane.xlu0 %520
        %v522 = vsel %vm491, %v513, 0.0
        %523 = vadd.xlane.f32.xlu0 %v522
        %v524 = vpop.xlane.xlu0 %523
        %v525 = vsel %vm491, %v515, 0.0
        %526 = vadd.xlane.f32.xlu0 %v525
        %v527 = vpop.xlane.xlu0 %526
        %v528 = vrcp.pop %v518
        %v529 = vmul.f32 %v518, %v528
        %v530 = vsub.f32 1.0, %v529
        %v531 = vmul.f32 %v528, %v530
        %v532 = vadd.f32 %v528, %v531
        %vm533 = vweird.f32 %v518
        %vm534 = vweird.f32 %v528
        %vm535 = vmor %vm533, %vm534
        %v536 = vsel %vm535, %v528, %v532
        %v537 = vand.u32 2147483647, %v518
        %vm538 = vcmp.eq.f32.partialorder %v537, 8.507059e+37
        %v539 = vand.u32 %v518, 2147483648
        %v540 = vor.u32 1.1754944e-38, %v539
        %v541 = vsel %vm538, %v540, %v536
        %v542 = vmul.f32 %v509, %v541
        %v543 = vrcp.pop %v521
        %v544 = vmul.f32 %v521, %v543
        %v545 = vsub.f32 1.0, %v544
        %v546 = vmul.f32 %v543, %v545
        %v547 = vadd.f32 %v543, %v546
        %vm548 = vweird.f32 %v521
        %vm549 = vweird.f32 %v543
        %vm550 = vmor %vm548, %vm549
        %v551 = vsel %vm550, %v543, %v547
        %v552 = vand.u32 2147483647, %v521
        %vm553 = vcmp.eq.f32.partialorder %v552, 8.507059e+37
        %v554 = vand.u32 %v521, 2147483648
        %v555 = vor.u32 1.1754944e-38, %v554
        %v556 = vsel %vm553, %v555, %v551
        %v557 = vmul.f32 %v511, %v556
        %v558 = vrcp.pop %v524
        %v559 = vmul.f32 %v524, %v558
        %v560 = vsub.f32 1.0, %v559
        %v561 = vmul.f32 %v558, %v560
        %v562 = vadd.f32 %v558, %v561
        %vm563 = vweird.f32 %v524
        %vm564 = vweird.f32 %v558
        %vm565 = vmor %vm563, %vm564
        %v566 = vsel %vm565, %v558, %v562
        %v567 = vand.u32 2147483647, %v524
        %vm568 = vcmp.eq.f32.partialorder %v567, 8.507059e+37
        %v569 = vand.u32 %v524, 2147483648
        %v570 = vor.u32 1.1754944e-38, %v569
        %v571 = vsel %vm568, %v570, %v566
        %v572 = vmul.f32 %v513, %v571
        %v573 = vrcp.pop %v527
        %v574 = vmul.f32 %v527, %v573
        %v575 = vsub.f32 1.0, %v574
        %v576 = vmul.f32 %v573, %v575
        %v577 = vadd.f32 %v573, %v576
        %vm578 = vweird.f32 %v527
        %vm579 = vweird.f32 %v573
        %vm580 = vmor %vm578, %vm579
        %v581 = vsel %vm580, %v573, %v577
        %v582 = vand.u32 2147483647, %v527
        %vm583 = vcmp.eq.f32.partialorder %v582, 8.507059e+37
        %v584 = vand.u32 %v527, 2147483648
        %v585 = vor.u32 1.1754944e-38, %v584
        %v586 = vsel %vm583, %v585, %v581
        %v587 = vmul.f32 %v515, %v586
        %v589 = vsel %vm491, %v542, 0
        %591 = vmatpush.msra.mxu0 0.0
        %592 = vmatpush.msra.mxu0 0.0
        %593 = vmatpush.msra.mxu0 0.0
        %594 = vmatpush.msra.mxu0 0.0
        %595 = vmatpush.msra.mxu0 0.0
        %596 = vmatpush.msra.mxu0 0.0
        %597 = vmatpush.msra.mxu0 0.0
        %598 = vmatpush.msra.mxu0 0.0
        %599 = vmatpush.msra.mxu0 0.0
        %600 = vmatpush.msra.mxu0 0.0
        %601 = vmatpush.msra.mxu0 0.0
        %602 = vmatpush.msra.mxu0 0.0
        %603 = vmatpush.msra.mxu0 0.0
        %604 = vmatpush.msra.mxu0 0.0
        %605 = vmatpush.msra.mxu0 0.0
        %606 = vmatpush.msra.mxu0 %v382
        %607 = vmatmul.f32.gmra.mxu0 %v589
        %v608 = vpop.f32.mrf.mxu0
        %v609 = vadd.f32 0.0, %v608
        %610 = vdwg.mxu0
        %v612 = vsel %vm491, %v557, 0
        %614 = vmatpush.msra.mxu0 0.0
        %615 = vmatpush.msra.mxu0 0.0
        %616 = vmatpush.msra.mxu0 0.0
        %617 = vmatpush.msra.mxu0 0.0
        %618 = vmatpush.msra.mxu0 0.0
        %619 = vmatpush.msra.mxu0 0.0
        %620 = vmatpush.msra.mxu0 0.0
        %621 = vmatpush.msra.mxu0 0.0
        %622 = vmatpush.msra.mxu0 0.0
        %623 = vmatpush.msra.mxu0 0.0
        %624 = vmatpush.msra.mxu0 0.0
        %625 = vmatpush.msra.mxu0 0.0
        %626 = vmatpush.msra.mxu0 0.0
        %627 = vmatpush.msra.mxu0 0.0
        %628 = vmatpush.msra.mxu0 0.0
        %629 = vmatpush.msra.mxu0 %v383
        %630 = vmatmul.f32.gmra.mxu0 %v612
        %v631 = vpop.f32.mrf.mxu0
        %v632 = vadd.f32 0.0, %v631
        %633 = vdwg.mxu0
        %v635 = vsel %vm491, %v572, 0
        %637 = vmatpush.msra.mxu0 0.0
        %638 = vmatpush.msra.mxu0 0.0
        %639 = vmatpush.msra.mxu0 0.0
        %640 = vmatpush.msra.mxu0 0.0
        %641 = vmatpush.msra.mxu0 0.0
        %642 = vmatpush.msra.mxu0 0.0
        %643 = vmatpush.msra.mxu0 0.0
        %644 = vmatpush.msra.mxu0 0.0
        %645 = vmatpush.msra.mxu0 0.0
        %646 = vmatpush.msra.mxu0 0.0
        %647 = vmatpush.msra.mxu0 0.0
        %648 = vmatpush.msra.mxu0 0.0
        %649 = vmatpush.msra.mxu0 0.0
        %650 = vmatpush.msra.mxu0 0.0
        %651 = vmatpush.msra.mxu0 0.0
        %652 = vmatpush.msra.mxu0 %v384
        %653 = vmatmul.f32.gmra.mxu0 %v635
        %v654 = vpop.f32.mrf.mxu0
        %v655 = vadd.f32 0.0, %v654
        %656 = vdwg.mxu0
        %v658 = vsel %vm491, %v587, 0
        %660 = vmatpush.msra.mxu0 0.0
        %661 = vmatpush.msra.mxu0 0.0
        %662 = vmatpush.msra.mxu0 0.0
        %663 = vmatpush.msra.mxu0 0.0
        %664 = vmatpush.msra.mxu0 0.0
        %665 = vmatpush.msra.mxu0 0.0
        %666 = vmatpush.msra.mxu0 0.0
        %667 = vmatpush.msra.mxu0 0.0
        %668 = vmatpush.msra.mxu0 0.0
        %669 = vmatpush.msra.mxu0 0.0
        %670 = vmatpush.msra.mxu0 0.0
        %671 = vmatpush.msra.mxu0 0.0
        %672 = vmatpush.msra.mxu0 0.0
        %673 = vmatpush.msra.mxu0 0.0
        %674 = vmatpush.msra.mxu0 0.0
        %675 = vmatpush.msra.mxu0 %v385
        %676 = vmatmul.f32.gmra.mxu0 %v658
        %v677 = vpop.f32.mrf.mxu0
        %v678 = vadd.f32 0.0, %v677
        %679 = vdwg.mxu0
        %680 = vst.msk [vmem:[%s344] sm:$0xff] %vm386, %v609
        %681 = vst.msk [vmem:[%s344 + $0x8] sm:$0xff] %vm386, %v632
        %682 = vst.msk [vmem:[%s344 + $0x10] sm:$0xff] %vm386, %v655
        %683 = vst.msk [vmem:[%s344 + $0x18] sm:$0xff] %vm386, %v678
        %684 = vst.msk [vmem:[%s351] sm:$0xff] %vm491, %v542
        %685 = vst.msk [vmem:[%s351 + $0x8] sm:$0xff] %vm491, %v557
        %686 = vst.msk [vmem:[%s351 + $0x10] sm:$0xff] %vm491, %v572
        %687 = vst.msk [vmem:[%s351 + $0x18] sm:$0xff] %vm491, %v587
        %s688 = sand.u32 %s145, 1
        %s689 = scalar_lea.sflag [#allocation5], %s688
        %s690 = sand.u32 %s145, 1
        %s691 = smul.addr %s690, 32
        %s692 = scalar_lea.vmem [#allocation9], %s691
        %s693 = sand.u32 %s175, 1
        %s694 = scalar_lea.sflag [#allocation11], %s693
        %s695 = sand.u32 %s175, 1
        %s696 = smul.addr %s695, 32
        %s697 = scalar_lea.vmem [#allocation10], %s696
        // Predicated region
        $region49: #{tpu_custom_call.1} parent=31 // pred_check
          %p698 = pneg %p155
        $region50: #{tpu_custom_call.1} parent=31 // pred_check_branch
          %700 = sbr.rel (%p698) target = $region52
        $region51: #{tpu_custom_call.1} parent=31 // pred_region
          %s701 = smul.u32 4, %s34
          %703 = vsyncadd %s689, 0
          %s704 = sadd.s32 %s35, %s701
          %s705 = smul.addr %s33, 4
          %s706 = sadd.s32 %s704, %s705
          %s707 = smul.addr %s706, 8
          %s708 = scalar_lea.hbm %s3, %s707
          %s709 = sshll.u32 %s692, 4
          %s710 = int_to_ptr.vmem [resolvable:$true] %s709
          %s711 = sshll.u32 %s708, 4
          %s712 = int_to_ptr.hbm [resolvable:$true] %s711
          %717 = dma.vmem_to_hbm [thread:$0]  %s710, 512, %s712, %s689, 128, 128, 8
        $region52: #{tpu_custom_call.1} parent=31 // pred_fallthru
          _
        // Predicated region
        $region53: #{tpu_custom_call.1} parent=31 // pred_check
          %p718 = pneg %p185
        $region54: #{tpu_custom_call.1} parent=31 // pred_check_branch
          %720 = sbr.rel (%p718) target = $region56
        $region55: #{tpu_custom_call.1} parent=31 // pred_region
          %s721 = smul.u32 4, %s34
          %723 = vsyncadd %s694, 0
          %s724 = sadd.s32 %s35, %s721
          %s725 = smul.addr %s33, 4
          %s726 = sadd.s32 %s724, %s725
          %s727 = smul.addr %s726, 8
          %s728 = scalar_lea.hbm %s4, %s727
          %s729 = sshll.u32 %s697, 4
          %s730 = int_to_ptr.vmem [resolvable:$true] %s729
          %s731 = sshll.u32 %s728, 4
          %s732 = int_to_ptr.hbm [resolvable:$true] %s731
          %737 = dma.vmem_to_hbm [thread:$0]  %s730, 512, %s732, %s694, 128, 128, 8
        $region56: #{tpu_custom_call.1} parent=31 // pred_fallthru
          _
      $region32: #{tpu_custom_call.1} parent=5 // pred_fallthru
        _
      %p738 = scmp.le.s32.totalorder 2, %s23
      // Predicated region
      $region57: #{tpu_custom_call.1} parent=5 // pred_check
        %p739 = pneg %p738
      $region58: #{tpu_custom_call.1} parent=5 // pred_check_branch
        %741 = sbr.rel (%p739) target = $region60
      $region59: #{tpu_custom_call.1} parent=5 // pred_region
        %s742 = ssub.s32 %s23, 2
        // Predicated region
        $region61: #{tpu_custom_call.1} parent=59 // pred_check
          %p743 = pneg %p161
        $region62: #{tpu_custom_call.1} parent=59 // pred_check_branch
          %745 = sbr.rel (%p743) target = $region64
        $region63: #{tpu_custom_call.1} parent=59 // pred_region
          %s746 = sand.u32 %s146, 1
          %s747 = scalar_lea.sflag [#allocation5], %s746
          %s748 = sand.u32 %s146, 1
          %s749 = smul.addr %s748, 32
          %s750 = scalar_lea.vmem [#allocation9], %s749
          %752 = dma.done %s747, 512
        $region64: #{tpu_custom_call.1} parent=59 // pred_fallthru
          _
        // Predicated region
        $region65: #{tpu_custom_call.1} parent=59 // pred_check
          %p753 = pneg %p191
        $region66: #{tpu_custom_call.1} parent=59 // pred_check_branch
          %755 = sbr.rel (%p753) target = $region68
        $region67: #{tpu_custom_call.1} parent=59 // pred_region
          %s756 = sand.u32 %s176, 1
          %s757 = scalar_lea.sflag [#allocation11], %s756
          %s758 = sand.u32 %s176, 1
          %s759 = smul.addr %s758, 32
          %s760 = scalar_lea.vmem [#allocation10], %s759
          %762 = dma.done %s757, 512
        $region68: #{tpu_custom_call.1} parent=59 // pred_fallthru
          _
      $region60: #{tpu_custom_call.1} parent=5 // pred_fallthru
        _
    $region6: #{tpu_custom_call.1} parent=1 // loop_footer
      %s27 = sadd.s32 1, %s23
    $region7: #{tpu_custom_call.1} parent=1 // loop_footer_branch
      %22 = sbr.rel target = $region3
    $region8: #{tpu_custom_call.1} parent=1 // loop_exit
      _
    %763 = vsyncpa [#allocation4], 1
    %s764 = scalar_lea.sflag [#allocation4], 1
    %765 = vsyncpa %s764, 1
    %766 = vsyncpa [#allocation7], 1
    %s767 = scalar_lea.sflag [#allocation7], 1
    %768 = vsyncpa %s767, 1
    %769 = vsyncpa [#allocation5], 1
    %s770 = scalar_lea.sflag [#allocation5], 1
    %771 = vsyncpa %s770, 1
    %772 = vsyncpa [#allocation11], 1
    %s773 = scalar_lea.sflag [#allocation11], 1
    %774 = vsyncpa %s773, 1

</llo_original>
